<compile_context>
chip_gen: v7x
topology: tpu7x:2x2x1
jax: 0.10.0
libtpu: 0.0.40
codegen_flags: <defaults>
</compile_context>

<pallas_src>
import functools

import jax
import jax.numpy as jnp
from jax.experimental import pallas as pl
from jax.experimental.pallas import tpu as pltpu


# ------------------------------ helpers ---------------------------------------

def _pick_block_rows(total_rows, target=512):
    """Largest row-tile <= target that divides total_rows (multiple of 8)."""
    if total_rows <= target:
        return total_rows
    for cand in range(min(target, total_rows), 7, -1):
        if cand % 8 == 0 and total_rows % cand == 0:
            return cand
    return total_rows  # single full block (always legal per BlockSpec rules)


def _uniform_bits(row0, tm, d, seed):
    """Stateless per-element uint32 hash (murmur3 finalizer).

    Deterministic in (global element index, seed), independent of tiling, and
    lowers with plain jnp ops (works on TPU hardware and in interpret mode).
    """
    rows = row0 + jax.lax.broadcasted_iota(jnp.int32, (tm, d), 0)
    cols = jax.lax.broadcasted_iota(jnp.int32, (tm, d), 1)
    idx = (rows * d + cols).astype(jnp.uint32)
    h = idx + jnp.uint32((int(seed) * 0x9E3779B1) & 0xFFFFFFFF)
    h = h ^ (h >> 16)
    h = h * jnp.uint32(0x85EBCA6B)
    h = h ^ (h >> 13)
    h = h * jnp.uint32(0xC2B2AE35)
    h = h ^ (h >> 16)
    return h


# --------------------- fused LN + Linear + dropout + residual ------------------

def _fused_residual_kernel(x_ref, w_ref, b_ref, o_ref, *,
                           eps, alpha, beta, rate, seed):
    tm, d = x_ref.shape
    x = x_ref[...].astype(jnp.float32)

    # LayerNormalization (torch.std default: unbiased, ddof = 1)
    mean = jnp.mean(x, axis=-1, keepdims=True)
    xm = x - mean
    var = jnp.sum(xm * xm, axis=-1, keepdims=True) * (1.0 / (d - 1))
    std = jnp.sqrt(var)
    normed = alpha * xm / (std + eps) + beta

    # Sublayer: Linear(d_model, d_model). Weight/bias are VMEM-resident
    # (same block for every grid step); f32 MXU accumulation.
    y = jnp.dot(normed, w_ref[...], preferred_element_type=jnp.float32)
    y = y + b_ref[...]

    # Inverted dropout: integer-threshold compare on raw hash bits.
    if rate > 0.0:
        row0 = pl.program_id(0) * tm
        bits = _uniform_bits(row0, tm, d, seed)
        thr = jnp.uint32(min(int(round(rate * (2 ** 32))), 2 ** 32 - 1))
        keep = bits >= thr                      # P(keep) = 1 - rate
        y = jnp.where(keep, y * (1.0 / (1.0 - rate)), 0.0)

    o_ref[...] = (x + y).astype(o_ref.dtype)


def residual_connection_fused(x, w, b, *, dropout_rate=0.0, seed=0, eps=1e-6,
                              alpha=1.0, beta=1.0, block_rows=None):
    """x: (batch, seq, d_model); w: (d_model, d_model); b: (d_model,)."""
    B, S, D = x.shape
    R = B * S
    x2d = x.reshape(R, D)
    b2d = b.reshape(1, D)

    tm = block_rows if block_rows is not None else _pick_block_rows(R)
    assert R % tm == 0, "row tile must divide total rows"
    grid = (R // tm,)

    # VMEM budget: double-buffered x/out tiles + resident weight + bias + slack.
    tile_bytes = tm * D * 4
    w_bytes = D * D * w.dtype.itemsize
    vmem_limit = int(min(64 * 1024 * 1024,
                         max(16 * 1024 * 1024,
                             6 * tile_bytes + 2 * w_bytes + (1 << 20))))

    kernel = functools.partial(
        _fused_residual_kernel,
        eps=float(eps), alpha=float(alpha), beta=float(beta),
        rate=float(dropout_rate), seed=int(seed))

    out2d = pl.pallas_call(
        kernel,
        out_shape=jax.ShapeDtypeStruct((R, D), x.dtype),
        grid=grid,
        in_specs=[
            pl.BlockSpec((tm, D), lambda i: (i, 0)),   # x row tile
            pl.BlockSpec((D, D), lambda i: (0, 0)),    # resident weight
            pl.BlockSpec((1, D), lambda i: (0, 0)),    # resident bias
        ],
        out_specs=pl.BlockSpec((tm, D), lambda i: (i, 0)),
        compiler_params=pltpu.CompilerParams(
            dimension_semantics=("parallel",),
            vmem_limit_bytes=vmem_limit),
    )(x2d, w, b2d)
    return out2d.reshape(B, S, D)


# ------------------------------------ main -------------------------------------

if __name__ == "__main__":
    B, S, D = 2, 8, 128
    key = jax.random.PRNGKey(0)
    kx, kw, kb = jax.random.split(key, 3)

    x = jax.random.normal(kx, (B, S, D), dtype=jnp.float32)
    w = jax.random.normal(kw, (D, D), dtype=jnp.float32) * 0.02
    b = jax.random.normal(kb, (D,), dtype=jnp.float32) * 0.01

    # --- correctness check against a pure-JAX reference (dropout disabled) ---
    out_nodrop = residual_connection_fused(x, w, b, dropout_rate=0.0)
    out_nodrop = jax.block_until_ready(out_nodrop)

    def ref(x):
        mean = jnp.mean(x, axis=-1, keepdims=True)
        var = jnp.sum((x - mean) ** 2, axis=-1, keepdims=True) / (x.shape[-1] - 1)
        std = jnp.sqrt(var)
        n = 1.0 * (x - mean) / (std + 1e-6) + 1.0
        s = jnp.einsum("bsd,de->bse", n, w) + b
        return x + s

    assert jnp.allclose(out_nodrop, ref(x), atol=1e-4, rtol=1e-4), \
        "mismatch vs reference"

    # --- run with dropout active (training-mode semantics) ---
    out_drop = residual_connection_fused(x, w, b, dropout_rate=0.1, seed=123)
    out_drop = jax.block_until_ready(out_drop)
    assert out_drop.shape == (B, S, D)
    assert bool(jnp.all(jnp.isfinite(out_drop)))

    print("KERNEL_OK")
</pallas_src>

<mosaic_0001>
module attributes {stable_mosaic.version = 11 : i64} {
  func.func @_fused_residual_kernel(%arg0: i32, %arg1: memref<16x128xf32, #tpu.memory_space<vmem>>, %arg2: memref<128x128xf32, #tpu.memory_space<vmem>>, %arg3: memref<1x128xf32, #tpu.memory_space<vmem>>, %arg4: memref<16x128xf32, #tpu.memory_space<vmem>>) attributes {dimension_semantics = [#tpu.dimension_semantics<parallel>], iteration_bounds = array<i64: 1>, scalar_prefetch = 0 : i64, scratch_operands = 0 : i64, tpu.core_type = #tpu.core_type<tc>, window_params = [{transform_indices = @transform_0, window_bounds = array<i64: 16, 128>}, {pipeline_mode = #tpu.pipeline_mode<synchronous>, transform_indices = @transform_1, window_bounds = array<i64: 128, 128>}, {pipeline_mode = #tpu.pipeline_mode<synchronous>, transform_indices = @transform_2, window_bounds = array<i64: 1, 128>}, {transform_indices = @transform_3, window_bounds = array<i64: 16, 128>}]} {
    %c0 = arith.constant 0 : index
    %c0_0 = arith.constant 0 : index
    %0 = vector.load %arg1[%c0, %c0_0] : memref<16x128xf32, #tpu.memory_space<vmem>>, vector<16x128xf32>
    %cst = arith.constant dense<0.000000e+00> : vector<16xf32>
    %1 = vector.multi_reduction <add>, %0, %cst [1] : vector<16x128xf32> to vector<16xf32>
    %2 = vector.shape_cast %1 : vector<16xf32> to vector<16x1xf32>
    %cst_1 = arith.constant 1.280000e+02 : f32
    %3 = vector.broadcast %cst_1 : f32 to vector<16x1xf32>
    %4 = arith.divf %2, %3 : vector<16x1xf32>
    %5 = vector.broadcast %4 : vector<16x1xf32> to vector<16x128xf32>
    %6 = arith.subf %0, %5 : vector<16x128xf32>
    %7 = arith.mulf %6, %6 : vector<16x128xf32>
    %cst_2 = arith.constant dense<0.000000e+00> : vector<16xf32>
    %8 = vector.multi_reduction <add>, %7, %cst_2 [1] : vector<16x128xf32> to vector<16xf32>
    %9 = vector.shape_cast %8 : vector<16xf32> to vector<16x1xf32>
    %cst_3 = arith.constant 0.00787401571 : f32
    %10 = vector.broadcast %cst_3 : f32 to vector<16x1xf32>
    %11 = arith.mulf %9, %10 : vector<16x1xf32>
    %12 = math.sqrt %11 : vector<16x1xf32>
    %cst_4 = arith.constant 1.000000e+00 : f32
    %13 = vector.broadcast %cst_4 : f32 to vector<16x128xf32>
    %14 = arith.mulf %13, %6 : vector<16x128xf32>
    %cst_5 = arith.constant 9.99999997E-7 : f32
    %15 = vector.broadcast %cst_5 : f32 to vector<16x1xf32>
    %16 = arith.addf %12, %15 : vector<16x1xf32>
    %17 = vector.broadcast %16 : vector<16x1xf32> to vector<16x128xf32>
    %18 = arith.divf %14, %17 : vector<16x128xf32>
    %cst_6 = arith.constant 1.000000e+00 : f32
    %19 = vector.broadcast %cst_6 : f32 to vector<16x128xf32>
    %20 = arith.addf %18, %19 : vector<16x128xf32>
    %c0_7 = arith.constant 0 : index
    %c0_8 = arith.constant 0 : index
    %21 = vector.load %arg2[%c0_7, %c0_8] : memref<128x128xf32, #tpu.memory_space<vmem>>, vector<128x128xf32>
    %cst_9 = arith.constant dense<0.000000e+00> : vector<16x128xf32>
    %22 = tpu.matmul %20, %21, %cst_9 {dimension_numbers = #tpu.dot_dimension_numbers<[1], [0], [0], [1], [0, 0, 1, 1], [], []>} : vector<16x128xf32>, vector<128x128xf32>, vector<16x128xf32> -> vector<16x128xf32>
    %c0_10 = arith.constant 0 : index
    %c0_11 = arith.constant 0 : index
    %23 = vector.load %arg3[%c0_10, %c0_11] : memref<1x128xf32, #tpu.memory_space<vmem>>, vector<1x128xf32>
    %24 = vector.broadcast %23 : vector<1x128xf32> to vector<16x128xf32>
    %25 = arith.addf %22, %24 : vector<16x128xf32>
    %26 = arith.addf %0, %25 : vector<16x128xf32>
    %c0_12 = arith.constant 0 : index
    %c0_13 = arith.constant 0 : index
    %27 = vector.load %arg4[%c0_12, %c0_13] : memref<16x128xf32, #tpu.memory_space<vmem>>, vector<16x128xf32>
    tpu.vector_store %arg4[%c0_12, %c0_13], %26 {strides = array<i32>} : memref<16x128xf32, #tpu.memory_space<vmem>>, vector<16x128xf32>,
    return
  }
  func.func @transform_0(%arg0: i32) -> (i32, i32) {
    %c0_i32 = arith.constant 0 : i32
    %c0_i32_0 = arith.constant 0 : i32
    return %arg0, %c0_i32 : i32, i32
  }
  func.func @transform_1(%arg0: i32) -> (i32, i32) {
    %c0_i32 = arith.constant 0 : i32
    %c0_i32_0 = arith.constant 0 : i32
    %c0_i32_1 = arith.constant 0 : i32
    return %c0_i32, %c0_i32_0 : i32, i32
  }
  func.func @transform_2(%arg0: i32) -> (i32, i32) {
    %c0_i32 = arith.constant 0 : i32
    %c0_i32_0 = arith.constant 0 : i32
    %c0_i32_1 = arith.constant 0 : i32
    return %c0_i32, %c0_i32_0 : i32, i32
  }
  func.func @transform_3(%arg0: i32) -> (i32, i32) {
    %c0_i32 = arith.constant 0 : i32
    %c0_i32_0 = arith.constant 0 : i32
    return %arg0, %c0_i32 : i32, i32
  }
}

</mosaic_0001>

<llo_original>
// kernel: tpu_custom_call.1
$region0: #{tpu_custom_call.1}
  #allocation0 [shape = 'u32[]', space=smem, size = 0x4, offset = 0x4, fixed_abs, tag = 'smem constant byte address 0x4 - core index']
  #allocation1 [shape = 'u32[144,128]{1,0:T(1,128)}', space=vmem, size = 0x12000, scoped, tag = 'internal scratch']
  %s0 = inlined_call_operand.hbm [shape: f32[16,128], index: 0, kind: input, shape index: {}]
  %s1 = inlined_call_operand.hbm [shape: f32[128,128], index: 1, kind: input, shape index: {}]
  %s2 = inlined_call_operand.vmem [shape: f32[1,128], index: 2, kind: input, shape index: {}]
  %s3 = inlined_call_operand.hbm [shape: f32[16,128], index: 3, kind: output, shape index: {}]
  %s4 = sld [smem:[#allocation0]]
  $region30: #{tpu_custom_call.1} parent=0
    _
  %s6 = ssub.s32 1, %s4
  %s7 = scalar_select 0, %s6, %s4
  $region1: #{tpu_custom_call.1} parent=0
    #allocation2 [shape = 'u8[8192]{0}', space=vmem, size = 0x2000, scoped, tag = 'input window, operand 0, single buffered']
    #allocation3 [shape = 's32[1]{0}', space=sflag, size = 0x4, scoped, tag = 'scoped memory for tpu_custom_call.1']
    #allocation4 [shape = 's32[1]{0}', space=sflag, size = 0x4, scoped, tag = 'scoped memory for tpu_custom_call.1']
    #allocation5 [shape = 'u8[65536]{0}', space=vmem, size = 0x10000, scoped, tag = 'input window, operand 1, single buffered']
    #allocation6 [shape = 's32[1]{0}', space=sflag, size = 0x4, scoped, tag = 'scoped memory for tpu_custom_call.1']
    #allocation7 [shape = 'u8[8192]{0}', space=vmem, size = 0x2000, scoped, tag = 'output window, operand 0, single buffered']
    %8 = vsyncpa [#allocation3], 0
    %9 = vsyncpa [#allocation6], 0
    %10 = vsyncpa [#allocation4], 0
    // Predicated region
    $region2: #{tpu_custom_call.1} parent=1 // pred_check
      _
    $region3: #{tpu_custom_call.1} parent=1 // pred_check_branch
      %12 = sbr.rel (0) target = $region5
    $region4: #{tpu_custom_call.1} parent=1 // pred_region
      %s14 = ssub.s32 256, 256
      %15 = vsyncadd [#allocation3], %s14
      %s16 = sshll.u32 [#allocation2], 4
      %s17 = int_to_ptr.vmem [resolvable:$true] %s16
      %22 = dma.hbm_to_vmem [thread:$0]  %s0, 256, %s17, [#allocation3], 128, 128, 8
    $region5: #{tpu_custom_call.1} parent=1 // pred_fallthru
      _
    // Predicated region
    $region6: #{tpu_custom_call.1} parent=1 // pred_check
      _
    $region7: #{tpu_custom_call.1} parent=1 // pred_check_branch
      %24 = sbr.rel (0) target = $region9
    $region8: #{tpu_custom_call.1} parent=1 // pred_region
      %s26 = ssub.s32 2048, 2048
      %27 = vsyncadd [#allocation6], %s26
      %s28 = sshll.u32 [#allocation5], 4
      %s29 = int_to_ptr.vmem [resolvable:$true] %s28
      %34 = dma.hbm_to_vmem [thread:$0]  %s1, 2048, %s29, [#allocation6], 128, 128, 8
    $region9: #{tpu_custom_call.1} parent=1 // pred_fallthru
      _
    // Predicated region
    $region10: #{tpu_custom_call.1} parent=1 // pred_check
      _
    $region11: #{tpu_custom_call.1} parent=1 // pred_check_branch
      %36 = sbr.rel (0) target = $region13
    $region12: #{tpu_custom_call.1} parent=1 // pred_region
      _
    $region13: #{tpu_custom_call.1} parent=1 // pred_fallthru
      _
    // Predicated region
    $region14: #{tpu_custom_call.1} parent=1 // pred_check
      _
    $region15: #{tpu_custom_call.1} parent=1 // pred_check_branch
      %38 = sbr.rel (0) target = $region17
    $region16: #{tpu_custom_call.1} parent=1 // pred_region
      %39 = dma.done [#allocation3], 256
    $region17: #{tpu_custom_call.1} parent=1 // pred_fallthru
      _
    // Predicated region
    $region18: #{tpu_custom_call.1} parent=1 // pred_check
      _
    $region19: #{tpu_custom_call.1} parent=1 // pred_check_branch
      %41 = sbr.rel (0) target = $region21
    $region20: #{tpu_custom_call.1} parent=1 // pred_region
      %42 = dma.done [#allocation6], 2048
    $region21: #{tpu_custom_call.1} parent=1 // pred_fallthru
      _
    %v43 = vld [vmem:[#allocation2] sm:$0xff]
    %v44 = vld [vmem:[#allocation2 + $0x8] sm:$0xff]
    %45 = vadd.xlane.f32.xlu0 %v43
    %v46 = vpop.xlane.xlu0 %45
    %47 = vadd.xlane.f32.xlu0 %v44
    %v48 = vpop.xlane.xlu0 %47
    %v49 = vrcp.pop 128.0
    %v50 = vmul.f32 %v46, %v49
    %v51 = vmul.f32 %v48, %v49
    %v52 = vsub.f32 %v43, %v50
    %v53 = vsub.f32 %v44, %v51
    %v54 = vmul.f32 %v52, %v52
    %v55 = vmul.f32 %v53, %v53
    %56 = vadd.xlane.f32.xlu0 %v54
    %v57 = vpop.xlane.xlu0 %56
    %58 = vadd.xlane.f32.xlu0 %v55
    %v59 = vpop.xlane.xlu0 %58
    %v60 = vmul.f32 %v57, 0.007874016
    %v61 = vmul.f32 %v59, 0.007874016
    %v62 = vrsqrt.pop %v60
    %v63 = vmul.f32 %v60, %v62
    %vm64 = vcmp.eq.f32.partialorder %v60, inf
    %v65 = vsel %vm64, %v60, %v63
    %vm66 = vcmp.eq.f32.partialorder %v60, 0.0
    %v67 = vand.u32 %v60, 2147483648
    %v68 = vsel %vm66, %v67, %v65
    %v69 = vrsqrt.pop %v61
    %v70 = vmul.f32 %v61, %v69
    %vm71 = vcmp.eq.f32.partialorder %v61, inf
    %v72 = vsel %vm71, %v61, %v70
    %vm73 = vcmp.eq.f32.partialorder %v61, 0.0
    %v74 = vand.u32 %v61, 2147483648
    %v75 = vsel %vm73, %v74, %v72
    %v76 = vadd.f32 %v68, 1e-06
    %v77 = vadd.f32 %v75, 1e-06
    %v78 = vrcp.pop %v76
    %v79 = vmul.f32 %v52, %v78
    %v80 = vrcp.pop %v77
    %v81 = vmul.f32 %v53, %v80
    %v82 = vadd.f32 %v79, 1.0
    %v83 = vadd.f32 %v81, 1.0
    %v84 = vld [vmem:[#allocation5] sm:$0xff]
    %v85 = vld [vmem:[#allocation5 + $0x8] sm:$0xff]
    %v86 = vld [vmem:[#allocation5 + $0x10] sm:$0xff]
    %v87 = vld [vmem:[#allocation5 + $0x18] sm:$0xff]
    %v88 = vld [vmem:[#allocation5 + $0x20] sm:$0xff]
    %v89 = vld [vmem:[#allocation5 + $0x28] sm:$0xff]
    %v90 = vld [vmem:[#allocation5 + $0x30] sm:$0xff]
    %v91 = vld [vmem:[#allocation5 + $0x38] sm:$0xff]
    %v92 = vld [vmem:[#allocation5 + $0x40] sm:$0xff]
    %v93 = vld [vmem:[#allocation5 + $0x48] sm:$0xff]
    %v94 = vld [vmem:[#allocation5 + $0x50] sm:$0xff]
    %v95 = vld [vmem:[#allocation5 + $0x58] sm:$0xff]
    %v96 = vld [vmem:[#allocation5 + $0x60] sm:$0xff]
    %v97 = vld [vmem:[#allocation5 + $0x68] sm:$0xff]
    %v98 = vld [vmem:[#allocation5 + $0x70] sm:$0xff]
    %v99 = vld [vmem:[#allocation5 + $0x78] sm:$0xff]
    %v100 = vld [vmem:[%s2] sm:$0x1]
    %v102 = vlaneseq
    %v103 = vshrl.u32 %v102, 7
    %v104 = vsub.s32 0, %v103
    %v105 = vrot.slane %v100, %v104
    %107 = vmatprep.subr.mxu0 0.0
    %108 = vmatpush1.msra.mxu0 %v84
    %109 = vmatprep.subr.mxu0 0.0
    %110 = vmatpush1.msra.mxu0 %v85
    %111 = vmatprep.subr.mxu0 0.0
    %112 = vmatpush1.msra.mxu0 %v86
    %113 = vmatprep.subr.mxu0 0.0
    %114 = vmatpush1.msra.mxu0 %v87
    %115 = vmatprep.subr.mxu0 0.0
    %116 = vmatpush1.msra.mxu0 %v88
    %117 = vmatprep.subr.mxu0 0.0
    %118 = vmatpush1.msra.mxu0 %v89
    %119 = vmatprep.subr.mxu0 0.0
    %120 = vmatpush1.msra.mxu0 %v90
    %121 = vmatprep.subr.mxu0 0.0
    %122 = vmatpush1.msra.mxu0 %v91
    %123 = vmatprep.subr.mxu0 0.0
    %124 = vmatpush1.msra.mxu0 %v92
    %125 = vmatprep.subr.mxu0 0.0
    %126 = vmatpush1.msra.mxu0 %v93
    %127 = vmatprep.subr.mxu0 0.0
    %128 = vmatpush1.msra.mxu0 %v94
    %129 = vmatprep.subr.mxu0 0.0
    %130 = vmatpush1.msra.mxu0 %v95
    %131 = vmatprep.subr.mxu0 0.0
    %132 = vmatpush1.msra.mxu0 %v96
    %133 = vmatprep.subr.mxu0 0.0
    %134 = vmatpush1.msra.mxu0 %v97
    %135 = vmatprep.subr.mxu0 0.0
    %136 = vmatpush1.msra.mxu0 %v98
    %137 = vmatprep.subr.mxu0 0.0
    %138 = vmatpush1.msra.mxu0 %v99
    %139 = vmatprep.subr.mxu0 0.0
    %140 = vmatpush1.msra.mxu0 0.0
    %141 = vmatprep.subr.mxu0 0.0
    %142 = vmatpush1.msra.mxu0 0.0
    %143 = vmatprep.subr.mxu0 0.0
    %144 = vmatpush1.msra.mxu0 0.0
    %145 = vmatprep.subr.mxu0 0.0
    %146 = vmatpush1.msra.mxu0 0.0
    %147 = vmatprep.subr.mxu0 0.0
    %148 = vmatpush1.msra.mxu0 0.0
    %149 = vmatprep.subr.mxu0 0.0
    %150 = vmatpush1.msra.mxu0 0.0
    %151 = vmatprep.subr.mxu0 0.0
    %152 = vmatpush1.msra.mxu0 0.0
    %153 = vmatprep.subr.mxu0 0.0
    %154 = vmatpush1.msra.mxu0 0.0
    %155 = vmatprep.subr.mxu0 0.0
    %156 = vmatpush1.msra.mxu0 0.0
    %157 = vmatprep.subr.mxu0 0.0
    %158 = vmatpush1.msra.mxu0 0.0
    %159 = vmatprep.subr.mxu0 0.0
    %160 = vmatpush1.msra.mxu0 0.0
    %161 = vmatprep.subr.mxu0 0.0
    %162 = vmatpush1.msra.mxu0 0.0
    %163 = vmatprep.subr.mxu0 0.0
    %164 = vmatpush1.msra.mxu0 0.0
    %165 = vmatprep.subr.mxu0 0.0
    %166 = vmatpush1.msra.mxu0 0.0
    %167 = vmatprep.subr.mxu0 0.0
    %168 = vmatpush1.msra.mxu0 0.0
    %169 = vmatprep.subr.mxu0 0.0
    %170 = vmatpush1.msra.mxu0 0.0
    %171 = vmatprep.mubr.f32.mxu0 0.0
    %172 = vmatmul.mubr.f32.gmra.mrb[0].mxu0 %v82
    %v173 = vpop.f32.mrb[0].mxu0
    %v174 = vadd.f32 %v105, %v173
    %v175 = vpop.f32.mrb[0].mxu0
    %176 = vmatprep.mubr.f32.mxu0 0.0
    %177 = vmatmul.mubr.f32.gmra.mrb[0].mxu0 %v83
    %v178 = vpop.f32.mrb[0].mxu0
    %v179 = vadd.f32 %v105, %v178
    %v180 = vpop.f32.mrb[0].mxu0
    %181 = vdwg.mxu0
    %v182 = vadd.f32 %v43, %v174
    %v183 = vadd.f32 %v44, %v179
    %184 = vst [vmem:[#allocation7] sm:$0xff] %v182
    %185 = vst [vmem:[#allocation7 + $0x8] sm:$0xff] %v183
    // Predicated region
    $region22: #{tpu_custom_call.1} parent=1 // pred_check
      _
    $region23: #{tpu_custom_call.1} parent=1 // pred_check_branch
      %187 = sbr.rel (0) target = $region25
    $region24: #{tpu_custom_call.1} parent=1 // pred_region
      %s189 = ssub.s32 256, 256
      %190 = vsyncadd [#allocation4], %s189
      %s191 = sshll.u32 [#allocation7], 4
      %s192 = int_to_ptr.vmem [resolvable:$true] %s191
      %197 = dma.vmem_to_hbm [thread:$0]  %s192, 256, %s3, [#allocation4], 128, 128, 8
    $region25: #{tpu_custom_call.1} parent=1 // pred_fallthru
      _
    // Predicated region
    $region26: #{tpu_custom_call.1} parent=1 // pred_check
      _
    $region27: #{tpu_custom_call.1} parent=1 // pred_check_branch
      %199 = sbr.rel (0) target = $region29
    $region28: #{tpu_custom_call.1} parent=1 // pred_region
      %200 = dma.done [#allocation4], 256
    $region29: #{tpu_custom_call.1} parent=1 // pred_fallthru
      _
    %201 = vsyncpa [#allocation3], 1
    %202 = vsyncpa [#allocation6], 1
    %203 = vsyncpa [#allocation4], 1

</llo_original>
